<compile_context>
chip_gen: v7x
topology: tpu7x:2x2x1
jax: 0.10.0
libtpu: 0.0.40
codegen_flags: <defaults>
</compile_context>

<pallas_src>
import functools

import jax
import jax.numpy as jnp
from jax.experimental import pallas as pl
from jax.experimental.pallas import tpu as pltpu


def _round_up(x: int, m: int) -> int:
    return ((x + m - 1) // m) * m


def _vmem_capacity_bytes() -> int:
    """Generation-aware VMEM capacity (128 MiB v5e/v6e, 64 MiB per-TC v7x)."""
    try:
        return int(pltpu.get_tpu_info().vmem_capacity_bytes)
    except Exception:
        return 64 * 1024 * 1024  # conservative fallback (v7x per TensorCore)


def _regression_head_kernel(x_ref,
                            w1_ref, b1_ref,
                            w2_ref, b2_ref,
                            w3_ref, b3_ref,
                            w4_ref, b4_ref,
                            o_ref,
                            *, lane_dense_out: bool):
    # In-kernel bf16 cast of the batch tile (x is streamed from HBM as f32;
    # the VPU cast hides under the MXU and halves wrapper-side HBM traffic).
    xb = x_ref[...].astype(w1_ref.dtype)

    # Layers 1-3: bf16 MXU matmuls with f32 accumulation, f32 bias + ReLU.
    h = jnp.dot(xb, w1_ref[...], preferred_element_type=jnp.float32)
    h = jnp.maximum(h + b1_ref[...], 0.0)

    h = jnp.dot(h.astype(w2_ref.dtype), w2_ref[...],
                preferred_element_type=jnp.float32)
    h = jnp.maximum(h + b2_ref[...], 0.0)

    h = jnp.dot(h.astype(w3_ref.dtype), w3_ref[...],
                preferred_element_type=jnp.float32)
    h = jnp.maximum(h + b3_ref[...], 0.0)

    if lane_dense_out:
        # output_size == 1: last layer as (1, D8) x (TB, D8)^T -> (1, TB) in f32,
        # contracting the last dims on the MXU, so the result is a lane-dense
        # row and the store is unmasked full-lane vst (not 1-lane masked).
        o = jax.lax.dot_general(
            w4_ref[...], h,
            dimension_numbers=(((1,), (1,)), ((), ())),
            preferred_element_type=jnp.float32) + b4_ref[...]
        o_ref[...] = o[None].astype(o_ref.dtype)           # (1, 1, TB)
    else:
        # Generic output_size: final layer in f32 (matches the reference).
        o = jnp.dot(h, w4_ref[...],
                    preferred_element_type=jnp.float32) + b4_ref[...]
        o_ref[...] = o.astype(o_ref.dtype)


def _choose_batch_tile(B: int, D: int, tile_budget_bytes: int) -> int:
    """Adaptive batch tile: large enough to amortize grid-step overhead, small
    enough to fit VMEM, capped so v7x's two TensorCores both get work."""
    d2, d4, d8 = max(D // 2, 1), max(D // 4, 1), max(D // 8, 1)
    # Approx. VMEM bytes per batch row: double-buffered f32 x row, in-kernel
    # bf16 copy, f32 h1..h3 intermediates, tiny output row.
    bytes_per_row = 4 * 2 * D + 2 * D + 4 * (d2 + d4 + d8) + 16
    tb = tile_budget_bytes // max(bytes_per_row, 1)
    tb = max(256, min(4096, tb))            # amortize ~0.35us/grid step
    tb = (tb // 8) * 8                      # sublane-aligned
    # Guarantee >= 2 grid steps when possible so both v7x TCs get a tile.
    tb = min(tb, _round_up(pl.cdiv(B, 2), 8))
    tb = min(tb, _round_up(B, 8))
    return max(tb, 8)


def regression_head(x, prepared):
    """x: (B, d_embedding) float32. prepared: output of prepare_params()."""
    B, D = x.shape
    out_size = prepared["out_size"]
    lane_dense = out_size == 1

    w1, b1 = prepared["w1"], prepared["b1"]
    w2, b2 = prepared["w2"], prepared["b2"]
    w3, b3 = prepared["w3"], prepared["b3"]
    w4, b4 = prepared["w4"], prepared["b4"]
    resident_args = (w1, b1, w2, b2, w3, b3, w4, b4)

    def nbytes(a):
        return a.size * a.dtype.itemsize

    weight_bytes = sum(nbytes(a) for a in resident_args)
    vmem_cap = _vmem_capacity_bytes()

    # Adaptive batch tile sized against this generation's VMEM (minus weights).
    tile_budget = max(int(0.5 * vmem_cap) - 2 * weight_bytes, 4 * 1024 * 1024)
    TB = _choose_batch_tile(B, D, tile_budget)
    num_tiles = pl.cdiv(B, TB)
    B_pad = num_tiles * TB

    x_p = x if B_pad == B else jnp.pad(x, ((0, B_pad - B), (0, 0)))

    grid = (num_tiles,)
    x_spec = pl.BlockSpec((TB, D), lambda i: (i, 0))

    if lane_dense:
        # Lane-dense (1, 1, TB) blocks; last two block dims equal the full dims.
        out_shape = jax.ShapeDtypeStruct((num_tiles, 1, TB), jnp.float32)
        out_spec = pl.BlockSpec((1, 1, TB), lambda i: (i, 0, 0))
    else:
        out_shape = jax.ShapeDtypeStruct((B_pad, out_size), jnp.float32)
        out_spec = pl.BlockSpec((TB, out_size), lambda i: (i, 0))

    # VMEM limit: working-set estimate with slack, generation-aware clamp
    # (~96 MiB on 128 MiB parts, ~48 MiB on v7x's 64 MiB).
    d2, d4, d8 = w1.shape[1], w2.shape[1], w3.shape[1]
    tile_bytes = 2 * TB * D * 4 + 2 * TB * max(out_size, 1) * 4
    interm_bytes = TB * (2 * D + 4 * (d2 + d4 + d8))
    working_set = 2 * weight_bytes + tile_bytes + interm_bytes
    vmem_limit = int(min(max(int(1.5 * working_set), 16 * 1024 * 1024),
                         int(0.75 * vmem_cap)))

    flops = 2 * B_pad * (D * d2 + d2 * d4 + d4 * d8 + d8 * out_size)
    bytes_accessed = nbytes(x_p) + weight_bytes + B_pad * out_size * 4
    cost = pl.CostEstimate(flops=flops, transcendentals=0,
                           bytes_accessed=bytes_accessed)

    kernel = functools.partial(_regression_head_kernel,
                               lane_dense_out=lane_dense)
    compiler_params = pltpu.CompilerParams(
        dimension_semantics=("parallel",),   # batch tiles shard across v7x TCs
        vmem_limit_bytes=vmem_limit,
    )

    def resident_spec(a, single_buffer):
        # Full-array block, constant index_map -> resident in VMEM across tiles.
        if single_buffer:
            # Constant blocks never change: the default second pipeline buffer
            # is pure VMEM waste -> request single buffering.
            return pl.BlockSpec(a.shape, lambda i: (0, 0),
                                pipeline_mode=pl.Buffered(1))
        return pl.BlockSpec(a.shape, lambda i: (0, 0))

    out = None
    for single_buffer in (True, False):
        try:
            in_specs = [x_spec] + [resident_spec(a, single_buffer)
                                   for a in resident_args]
            call = pl.pallas_call(
                kernel,
                out_shape=out_shape,
                grid=grid,
                in_specs=in_specs,
                out_specs=out_spec,
                compiler_params=compiler_params,
                cost_estimate=cost,
            )
            out = call(x_p, *resident_args)
            break
        except Exception:
            # pipeline_mode=pl.Buffered(1) unsupported on this jax version:
            # fall back to default double-buffered resident weights.
            if not single_buffer:
                raise

    if lane_dense:
        return out.reshape(-1)[:B].reshape(B, 1)
    return out[:B]


def init_params(key, d_embedding, output_size=1):
    """Deterministic PyTorch-like init: U(-1/sqrt(fan_in), 1/sqrt(fan_in)).

    Weights are stored transposed, shape (in_features, out_features)."""
    dims = [d_embedding, d_embedding // 2, d_embedding // 4, d_embedding // 8,
            output_size]
    params = {}
    keys = jax.random.split(key, 8)
    for i in range(4):
        fan_in, fan_out = dims[i], dims[i + 1]
        bound = 1.0 / jnp.sqrt(fan_in)
        w = jax.random.uniform(keys[2 * i], (fan_in, fan_out),
                               minval=-bound, maxval=bound, dtype=jnp.float32)
        # bias kept 2D (1, out) so it broadcasts cleanly inside the kernel
        b = jax.random.uniform(keys[2 * i + 1], (1, fan_out),
                               minval=-bound, maxval=bound, dtype=jnp.float32)
        params[f"w{i + 1}"] = w
        params[f"b{i + 1}"] = b
    return params


def prepare_params(params):
    """One-time conversion (hoisted out of the forward path): bf16 MXU weights
    for layers 1-3, f32 final-layer weight (transposed to a (1, D8) row when
    output_size == 1), f32 biases."""
    out_size = params["w4"].shape[1]
    prepared = {
        "w1": params["w1"].astype(jnp.bfloat16),
        "w2": params["w2"].astype(jnp.bfloat16),
        "w3": params["w3"].astype(jnp.bfloat16),
        "b1": params["b1"].astype(jnp.float32),
        "b2": params["b2"].astype(jnp.float32),
        "b3": params["b3"].astype(jnp.float32),
        "b4": params["b4"].astype(jnp.float32),
        "out_size": out_size,
    }
    if out_size == 1:
        prepared["w4"] = params["w4"].astype(jnp.float32).T   # (1, D8) row
    else:
        prepared["w4"] = params["w4"].astype(jnp.float32)     # (D8, out)
    return prepared


def reference_forward(x, params):
    """Pure-JAX reference mirroring the kernel's bf16-MXU / f32-accumulate math
    (layers 1-3) and f32 final layer."""
    bf16 = jnp.bfloat16
    h = jnp.dot(x.astype(bf16), params["w1"].astype(bf16),
                preferred_element_type=jnp.float32)
    h = jnp.maximum(h + params["b1"], 0.0)
    h = jnp.dot(h.astype(bf16), params["w2"].astype(bf16),
                preferred_element_type=jnp.float32)
    h = jnp.maximum(h + params["b2"], 0.0)
    h = jnp.dot(h.astype(bf16), params["w3"].astype(bf16),
                preferred_element_type=jnp.float32)
    h = jnp.maximum(h + params["b3"], 0.0)
    return jnp.dot(h, params["w4"].astype(jnp.float32),
                   preferred_element_type=jnp.float32) + params["b4"]


if __name__ == "__main__":
    key = jax.random.PRNGKey(0)
    k_x1, k_p1, k_x2, k_p2, k_x3, k_p3 = jax.random.split(key, 6)

    # 1) Small single-tile config (typical regression-head shapes).
    x1 = jax.random.normal(k_x1, (8, 32), dtype=jnp.float32)
    params1 = init_params(k_p1, 32, output_size=1)
    out1 = jax.block_until_ready(regression_head(x1, prepare_params(params1)))
    ref1 = reference_forward(x1, params1)
    assert out1.shape == (8, 1)
    assert jnp.allclose(out1, ref1, atol=5e-3, rtol=5e-3), "mismatch (small)"

    # 2) Multi-tile + ragged batch (B % TB != 0), lane-dense output path.
    x2 = jax.random.normal(k_x2, (270, 256), dtype=jnp.float32)
    params2 = init_params(k_p2, 256, output_size=1)
    out2 = jax.block_until_ready(regression_head(x2, prepare_params(params2)))
    ref2 = reference_forward(x2, params2)
    assert out2.shape == (270, 1)
    assert jnp.allclose(out2, ref2, atol=5e-3, rtol=5e-3), "mismatch (tiled)"

    # 3) Generic output_size > 1 path (f32 final layer, matches reference).
    x3 = jax.random.normal(k_x3, (8, 32), dtype=jnp.float32)
    params3 = init_params(k_p3, 32, output_size=4)
    out3 = jax.block_until_ready(regression_head(x3, prepare_params(params3)))
    ref3 = reference_forward(x3, params3)
    assert out3.shape == (8, 4)
    assert jnp.allclose(out3, ref3, atol=5e-3, rtol=5e-3), "mismatch (generic)"

    print("KERNEL_OK")
</pallas_src>

<mosaic_0001>
module attributes {stable_mosaic.version = 11 : i64} {
  func.func @_regression_head_kernel(%arg0: i32, %arg1: memref<8x32xf32, #tpu.memory_space<vmem>>, %arg2: memref<32x16xbf16, #tpu.memory_space<vmem>>, %arg3: memref<1x16xf32, #tpu.memory_space<vmem>>, %arg4: memref<16x8xbf16, #tpu.memory_space<vmem>>, %arg5: memref<1x8xf32, #tpu.memory_space<vmem>>, %arg6: memref<8x4xbf16, #tpu.memory_space<vmem>>, %arg7: memref<1x4xf32, #tpu.memory_space<vmem>>, %arg8: memref<1x4xf32, #tpu.memory_space<vmem>>, %arg9: memref<1x1xf32, #tpu.memory_space<vmem>>, %arg10: memref<1x1x8xf32, #tpu.memory_space<vmem>>) attributes {dimension_semantics = [#tpu.dimension_semantics<parallel>], iteration_bounds = array<i64: 1>, scalar_prefetch = 0 : i64, scratch_operands = 0 : i64, tpu.core_type = #tpu.core_type<tc>, window_params = [{transform_indices = @transform_0, window_bounds = array<i64: 8, 32>}, {pipeline_mode = #tpu.pipeline_mode<synchronous>, transform_indices = @transform_1, window_bounds = array<i64: 32, 16>}, {pipeline_mode = #tpu.pipeline_mode<synchronous>, transform_indices = @transform_2, window_bounds = array<i64: 1, 16>}, {pipeline_mode = #tpu.pipeline_mode<synchronous>, transform_indices = @transform_3, window_bounds = array<i64: 16, 8>}, {pipeline_mode = #tpu.pipeline_mode<synchronous>, transform_indices = @transform_4, window_bounds = array<i64: 1, 8>}, {pipeline_mode = #tpu.pipeline_mode<synchronous>, transform_indices = @transform_5, window_bounds = array<i64: 8, 4>}, {pipeline_mode = #tpu.pipeline_mode<synchronous>, transform_indices = @transform_6, window_bounds = array<i64: 1, 4>}, {pipeline_mode = #tpu.pipeline_mode<synchronous>, transform_indices = @transform_7, window_bounds = array<i64: 1, 4>}, {pipeline_mode = #tpu.pipeline_mode<synchronous>, transform_indices = @transform_8, window_bounds = array<i64: 1, 1>}, {transform_indices = @transform_9, window_bounds = array<i64: 1, 1, 8>}]} {
    %c0 = arith.constant 0 : index
    %c0_0 = arith.constant 0 : index
    %0 = vector.load %arg1[%c0, %c0_0] : memref<8x32xf32, #tpu.memory_space<vmem>>, vector<8x32xf32>
    %1 = arith.truncf %0 : vector<8x32xf32> to vector<8x32xbf16>
    %c0_1 = arith.constant 0 : index
    %c0_2 = arith.constant 0 : index
    %2 = vector.load %arg2[%c0_1, %c0_2] : memref<32x16xbf16, #tpu.memory_space<vmem>>, vector<32x16xbf16>
    %cst = arith.constant dense<0.000000e+00> : vector<8x16xf32>
    %3 = tpu.matmul %1, %2, %cst {dimension_numbers = #tpu.dot_dimension_numbers<[1], [0], [0], [1], [0, 0, 1, 1], [], []>} : vector<8x32xbf16>, vector<32x16xbf16>, vector<8x16xf32> -> vector<8x16xf32>
    %c0_3 = arith.constant 0 : index
    %c0_4 = arith.constant 0 : index
    %4 = vector.load %arg3[%c0_3, %c0_4] : memref<1x16xf32, #tpu.memory_space<vmem>>, vector<1x16xf32>
    %5 = vector.broadcast %4 : vector<1x16xf32> to vector<8x16xf32>
    %6 = arith.addf %3, %5 : vector<8x16xf32>
    %cst_5 = arith.constant 0.000000e+00 : f32
    %7 = vector.broadcast %cst_5 : f32 to vector<8x16xf32>
    %8 = arith.maximumf %6, %7 : vector<8x16xf32>
    %9 = arith.truncf %8 : vector<8x16xf32> to vector<8x16xbf16>
    %c0_6 = arith.constant 0 : index
    %c0_7 = arith.constant 0 : index
    %10 = vector.load %arg4[%c0_6, %c0_7] : memref<16x8xbf16, #tpu.memory_space<vmem>>, vector<16x8xbf16>
    %cst_8 = arith.constant dense<0.000000e+00> : vector<8x8xf32>
    %11 = tpu.matmul %9, %10, %cst_8 {dimension_numbers = #tpu.dot_dimension_numbers<[1], [0], [0], [1], [0, 0, 1, 1], [], []>} : vector<8x16xbf16>, vector<16x8xbf16>, vector<8x8xf32> -> vector<8x8xf32>
    %c0_9 = arith.constant 0 : index
    %c0_10 = arith.constant 0 : index
    %12 = vector.load %arg5[%c0_9, %c0_10] : memref<1x8xf32, #tpu.memory_space<vmem>>, vector<1x8xf32>
    %13 = vector.broadcast %12 : vector<1x8xf32> to vector<8x8xf32>
    %14 = arith.addf %11, %13 : vector<8x8xf32>
    %cst_11 = arith.constant 0.000000e+00 : f32
    %15 = vector.broadcast %cst_11 : f32 to vector<8x8xf32>
    %16 = arith.maximumf %14, %15 : vector<8x8xf32>
    %17 = arith.truncf %16 : vector<8x8xf32> to vector<8x8xbf16>
    %c0_12 = arith.constant 0 : index
    %c0_13 = arith.constant 0 : index
    %18 = vector.load %arg6[%c0_12, %c0_13] : memref<8x4xbf16, #tpu.memory_space<vmem>>, vector<8x4xbf16>
    %cst_14 = arith.constant dense<0.000000e+00> : vector<8x4xf32>
    %19 = tpu.matmul %17, %18, %cst_14 {dimension_numbers = #tpu.dot_dimension_numbers<[1], [0], [0], [1], [0, 0, 1, 1], [], []>} : vector<8x8xbf16>, vector<8x4xbf16>, vector<8x4xf32> -> vector<8x4xf32>
    %c0_15 = arith.constant 0 : index
    %c0_16 = arith.constant 0 : index
    %20 = vector.load %arg7[%c0_15, %c0_16] : memref<1x4xf32, #tpu.memory_space<vmem>>, vector<1x4xf32>
    %21 = vector.broadcast %20 : vector<1x4xf32> to vector<8x4xf32>
    %22 = arith.addf %19, %21 : vector<8x4xf32>
    %cst_17 = arith.constant 0.000000e+00 : f32
    %23 = vector.broadcast %cst_17 : f32 to vector<8x4xf32>
    %24 = arith.maximumf %22, %23 : vector<8x4xf32>
    %c0_18 = arith.constant 0 : index
    %c0_19 = arith.constant 0 : index
    %25 = vector.load %arg8[%c0_18, %c0_19] : memref<1x4xf32, #tpu.memory_space<vmem>>, vector<1x4xf32>
    %cst_20 = arith.constant dense<0.000000e+00> : vector<1x8xf32>
    %26 = tpu.matmul %25, %24, %cst_20 {dimension_numbers = #tpu.dot_dimension_numbers<[1], [1], [0], [0], [0, 0, 1, 0], [], []>} : vector<1x4xf32>, vector<8x4xf32>, vector<1x8xf32> -> vector<1x8xf32>
    %c0_21 = arith.constant 0 : index
    %c0_22 = arith.constant 0 : index
    %27 = vector.load %arg9[%c0_21, %c0_22] : memref<1x1xf32, #tpu.memory_space<vmem>>, vector<1x1xf32>
    %28 = vector.broadcast %27 : vector<1x1xf32> to vector<1x8xf32>
    %29 = arith.addf %26, %28 : vector<1x8xf32>
    %30 = vector.shape_cast %29 : vector<1x8xf32> to vector<1x1x8xf32>
    %c0_23 = arith.constant 0 : index
    %c0_24 = arith.constant 0 : index
    %c0_25 = arith.constant 0 : index
    %31 = vector.load %arg10[%c0_23, %c0_24, %c0_25] : memref<1x1x8xf32, #tpu.memory_space<vmem>>, vector<1x1x8xf32>
    tpu.vector_store %arg10[%c0_23, %c0_24, %c0_25], %30 {strides = array<i32>} : memref<1x1x8xf32, #tpu.memory_space<vmem>>, vector<1x1x8xf32>,
    return
  }
  func.func @transform_0(%arg0: i32) -> (i32, i32) {
    %c0_i32 = arith.constant 0 : i32
    %c0_i32_0 = arith.constant 0 : i32
    return %arg0, %c0_i32 : i32, i32
  }
  func.func @transform_1(%arg0: i32) -> (i32, i32) {
    %c0_i32 = arith.constant 0 : i32
    %c0_i32_0 = arith.constant 0 : i32
    %c0_i32_1 = arith.constant 0 : i32
    return %c0_i32, %c0_i32_0 : i32, i32
  }
  func.func @transform_2(%arg0: i32) -> (i32, i32) {
    %c0_i32 = arith.constant 0 : i32
    %c0_i32_0 = arith.constant 0 : i32
    %c0_i32_1 = arith.constant 0 : i32
    return %c0_i32, %c0_i32_0 : i32, i32
  }
  func.func @transform_3(%arg0: i32) -> (i32, i32) {
    %c0_i32 = arith.constant 0 : i32
    %c0_i32_0 = arith.constant 0 : i32
    %c0_i32_1 = arith.constant 0 : i32
    return %c0_i32, %c0_i32_0 : i32, i32
  }
  func.func @transform_4(%arg0: i32) -> (i32, i32) {
    %c0_i32 = arith.constant 0 : i32
    %c0_i32_0 = arith.constant 0 : i32
    %c0_i32_1 = arith.constant 0 : i32
    return %c0_i32, %c0_i32_0 : i32, i32
  }
  func.func @transform_5(%arg0: i32) -> (i32, i32) {
    %c0_i32 = arith.constant 0 : i32
    %c0_i32_0 = arith.constant 0 : i32
    %c0_i32_1 = arith.constant 0 : i32
    return %c0_i32, %c0_i32_0 : i32, i32
  }
  func.func @transform_6(%arg0: i32) -> (i32, i32) {
    %c0_i32 = arith.constant 0 : i32
    %c0_i32_0 = arith.constant 0 : i32
    %c0_i32_1 = arith.constant 0 : i32
    return %c0_i32, %c0_i32_0 : i32, i32
  }
  func.func @transform_7(%arg0: i32) -> (i32, i32) {
    %c0_i32 = arith.constant 0 : i32
    %c0_i32_0 = arith.constant 0 : i32
    %c0_i32_1 = arith.constant 0 : i32
    return %c0_i32, %c0_i32_0 : i32, i32
  }
  func.func @transform_8(%arg0: i32) -> (i32, i32) {
    %c0_i32 = arith.constant 0 : i32
    %c0_i32_0 = arith.constant 0 : i32
    %c0_i32_1 = arith.constant 0 : i32
    return %c0_i32, %c0_i32_0 : i32, i32
  }
  func.func @transform_9(%arg0: i32) -> (i32, i32, i32) {
    %c0_i32 = arith.constant 0 : i32
    %c0_i32_0 = arith.constant 0 : i32
    %c0_i32_1 = arith.constant 0 : i32
    return %arg0, %c0_i32, %c0_i32_0 : i32, i32, i32
  }
}

module attributes {stable_mosaic.version = 11 : i64} {
  func.func @_regression_head_kernel(%arg0: i32, %arg1: memref<8x32xf32, #tpu.memory_space<vmem>>, %arg2: memref<32x16xbf16, #tpu.memory_space<vmem>>, %arg3: memref<1x16xf32, #tpu.memory_space<vmem>>, %arg4: memref<16x8xbf16, #tpu.memory_space<vmem>>, %arg5: memref<1x8xf32, #tpu.memory_space<vmem>>, %arg6: memref<8x4xbf16, #tpu.memory_space<vmem>>, %arg7: memref<1x4xf32, #tpu.memory_space<vmem>>, %arg8: memref<1x4xf32, #tpu.memory_space<vmem>>, %arg9: memref<1x1xf32, #tpu.memory_space<vmem>>, %arg10: memref<1x1x8xf32, #tpu.memory_space<vmem>>) attributes {dimension_semantics = [#tpu.dimension_semantics<parallel>], iteration_bounds = array<i64: 1>, scalar_prefetch = 0 : i64, scratch_operands = 0 : i64, tpu.core_type = #tpu.core_type<tc>, window_params = [{transform_indices = @transform_0, window_bounds = array<i64: 8, 32>}, {pipeline_mode = #tpu.pipeline_mode<synchronous>, transform_indices = @transform_1, window_bounds = array<i64: 32, 16>}, {pipeline_mode = #tpu.pipeline_mode<synchronous>, transform_indices = @transform_2, window_bounds = array<i64: 1, 16>}, {pipeline_mode = #tpu.pipeline_mode<synchronous>, transform_indices = @transform_3, window_bounds = array<i64: 16, 8>}, {pipeline_mode = #tpu.pipeline_mode<synchronous>, transform_indices = @transform_4, window_bounds = array<i64: 1, 8>}, {pipeline_mode = #tpu.pipeline_mode<synchronous>, transform_indices = @transform_5, window_bounds = array<i64: 8, 4>}, {pipeline_mode = #tpu.pipeline_mode<synchronous>, transform_indices = @transform_6, window_bounds = array<i64: 1, 4>}, {pipeline_mode = #tpu.pipeline_mode<synchronous>, transform_indices = @transform_7, window_bounds = array<i64: 1, 4>}, {pipeline_mode = #tpu.pipeline_mode<synchronous>, transform_indices = @transform_8, window_bounds = array<i64: 1, 1>}, {transform_indices = @transform_9, window_bounds = array<i64: 1, 1, 8>}]} {
    %c0 = arith.constant 0 : index
    %c0_0 = arith.constant 0 : index
    %0 = vector.load %arg1[%c0, %c0_0] : memref<8x32xf32, #tpu.memory_space<vmem>>, vector<8x32xf32>
    %1 = arith.truncf %0 : vector<8x32xf32> to vector<8x32xbf16>
    %c0_1 = arith.constant 0 : index
    %c0_2 = arith.constant 0 : index
    %2 = vector.load %arg2[%c0_1, %c0_2] : memref<32x16xbf16, #tpu.memory_space<vmem>>, vector<32x16xbf16>
    %cst = arith.constant dense<0.000000e+00> : vector<8x16xf32>
    %3 = tpu.matmul %1, %2, %cst {dimension_numbers = #tpu.dot_dimension_numbers<[1], [0], [0], [1], [0, 0, 1, 1], [], []>} : vector<8x32xbf16>, vector<32x16xbf16>, vector<8x16xf32> -> vector<8x16xf32>
    %c0_3 = arith.constant 0 : index
    %c0_4 = arith.constant 0 : index
    %4 = vector.load %arg3[%c0_3, %c0_4] : memref<1x16xf32, #tpu.memory_space<vmem>>, vector<1x16xf32>
    %5 = vector.broadcast %4 : vector<1x16xf32> to vector<8x16xf32>
    %6 = arith.addf %3, %5 : vector<8x16xf32>
    %cst_5 = arith.constant 0.000000e+00 : f32
    %7 = vector.broadcast %cst_5 : f32 to vector<8x16xf32>
    %8 = arith.maximumf %6, %7 : vector<8x16xf32>
    %9 = arith.truncf %8 : vector<8x16xf32> to vector<8x16xbf16>
    %c0_6 = arith.constant 0 : index
    %c0_7 = arith.constant 0 : index
    %10 = vector.load %arg4[%c0_6, %c0_7] : memref<16x8xbf16, #tpu.memory_space<vmem>>, vector<16x8xbf16>
    %cst_8 = arith.constant dense<0.000000e+00> : vector<8x8xf32>
    %11 = tpu.matmul %9, %10, %cst_8 {dimension_numbers = #tpu.dot_dimension_numbers<[1], [0], [0], [1], [0, 0, 1, 1], [], []>} : vector<8x16xbf16>, vector<16x8xbf16>, vector<8x8xf32> -> vector<8x8xf32>
    %c0_9 = arith.constant 0 : index
    %c0_10 = arith.constant 0 : index
    %12 = vector.load %arg5[%c0_9, %c0_10] : memref<1x8xf32, #tpu.memory_space<vmem>>, vector<1x8xf32>
    %13 = vector.broadcast %12 : vector<1x8xf32> to vector<8x8xf32>
    %14 = arith.addf %11, %13 : vector<8x8xf32>
    %cst_11 = arith.constant 0.000000e+00 : f32
    %15 = vector.broadcast %cst_11 : f32 to vector<8x8xf32>
    %16 = arith.maximumf %14, %15 : vector<8x8xf32>
    %17 = arith.truncf %16 : vector<8x8xf32> to vector<8x8xbf16>
    %c0_12 = arith.constant 0 : index
    %c0_13 = arith.constant 0 : index
    %18 = vector.load %arg6[%c0_12, %c0_13] : memref<8x4xbf16, #tpu.memory_space<vmem>>, vector<8x4xbf16>
    %cst_14 = arith.constant dense<0.000000e+00> : vector<8x4xf32>
    %19 = tpu.matmul %17, %18, %cst_14 {dimension_numbers = #tpu.dot_dimension_numbers<[1], [0], [0], [1], [0, 0, 1, 1], [], []>} : vector<8x8xbf16>, vector<8x4xbf16>, vector<8x4xf32> -> vector<8x4xf32>
    %c0_15 = arith.constant 0 : index
    %c0_16 = arith.constant 0 : index
    %20 = vector.load %arg7[%c0_15, %c0_16] : memref<1x4xf32, #tpu.memory_space<vmem>>, vector<1x4xf32>
    %21 = vector.broadcast %20 : vector<1x4xf32> to vector<8x4xf32>
    %22 = arith.addf %19, %21 : vector<8x4xf32>
    %cst_17 = arith.constant 0.000000e+00 : f32
    %23 = vector.broadcast %cst_17 : f32 to vector<8x4xf32>
    %24 = arith.maximumf %22, %23 : vector<8x4xf32>
    %c0_18 = arith.constant 0 : index
    %c0_19 = arith.constant 0 : index
    %25 = vector.load %arg8[%c0_18, %c0_19] : memref<1x4xf32, #tpu.memory_space<vmem>>, vector<1x4xf32>
    %cst_20 = arith.constant dense<0.000000e+00> : vector<1x8xf32>
    %26 = tpu.matmul %25, %24, %cst_20 {dimension_numbers = #tpu.dot_dimension_numbers<[1], [1], [0], [0], [0, 0, 1, 0], [], []>} : vector<1x4xf32>, vector<8x4xf32>, vector<1x8xf32> -> vector<1x8xf32>
    %c0_21 = arith.constant 0 : index
    %c0_22 = arith.constant 0 : index
    %27 = vector.load %arg9[%c0_21, %c0_22] : memref<1x1xf32, #tpu.memory_space<vmem>>, vector<1x1xf32>
    %28 = vector.broadcast %27 : vector<1x1xf32> to vector<1x8xf32>
    %29 = arith.addf %26, %28 : vector<1x8xf32>
    %30 = vector.shape_cast %29 : vector<1x8xf32> to vector<1x1x8xf32>
    %c0_23 = arith.constant 0 : index
    %c0_24 = arith.constant 0 : index
    %c0_25 = arith.constant 0 : index
    %31 = vector.load %arg10[%c0_23, %c0_24, %c0_25] : memref<1x1x8xf32, #tpu.memory_space<vmem>>, vector<1x1x8xf32>
    tpu.vector_store %arg10[%c0_23, %c0_24, %c0_25], %30 {strides = array<i32>} : memref<1x1x8xf32, #tpu.memory_space<vmem>>, vector<1x1x8xf32>,
    return
  }
  func.func @transform_0(%arg0: i32) -> (i32, i32) {
    %c0_i32 = arith.constant 0 : i32
    %c0_i32_0 = arith.constant 0 : i32
    return %arg0, %c0_i32 : i32, i32
  }
  func.func @transform_1(%arg0: i32) -> (i32, i32) {
    %c0_i32 = arith.constant 0 : i32
    %c0_i32_0 = arith.constant 0 : i32
    %c0_i32_1 = arith.constant 0 : i32
    return %c0_i32, %c0_i32_0 : i32, i32
  }
  func.func @transform_2(%arg0: i32) -> (i32, i32) {
    %c0_i32 = arith.constant 0 : i32
    %c0_i32_0 = arith.constant 0 : i32
    %c0_i32_1 = arith.constant 0 : i32
    return %c0_i32, %c0_i32_0 : i32, i32
  }
  func.func @transform_3(%arg0: i32) -> (i32, i32) {
    %c0_i32 = arith.constant 0 : i32
    %c0_i32_0 = arith.constant 0 : i32
    %c0_i32_1 = arith.constant 0 : i32
    return %c0_i32, %c0_i32_0 : i32, i32
  }
  func.func @transform_4(%arg0: i32) -> (i32, i32) {
    %c0_i32 = arith.constant 0 : i32
    %c0_i32_0 = arith.constant 0 : i32
    %c0_i32_1 = arith.constant 0 : i32
    return %c0_i32, %c0_i32_0 : i32, i32
  }
  func.func @transform_5(%arg0: i32) -> (i32, i32) {
    %c0_i32 = arith.constant 0 : i32
    %c0_i32_0 = arith.constant 0 : i32
    %c0_i32_1 = arith.constant 0 : i32
    return %c0_i32, %c0_i32_0 : i32, i32
  }
  func.func @transform_6(%arg0: i32) -> (i32, i32) {
    %c0_i32 = arith.constant 0 : i32
    %c0_i32_0 = arith.constant 0 : i32
    %c0_i32_1 = arith.constant 0 : i32
    return %c0_i32, %c0_i32_0 : i32, i32
  }
  func.func @transform_7(%arg0: i32) -> (i32, i32) {
    %c0_i32 = arith.constant 0 : i32
    %c0_i32_0 = arith.constant 0 : i32
    %c0_i32_1 = arith.constant 0 : i32
    return %c0_i32, %c0_i32_0 : i32, i32
  }
  func.func @transform_8(%arg0: i32) -> (i32, i32) {
    %c0_i32 = arith.constant 0 : i32
    %c0_i32_0 = arith.constant 0 : i32
    %c0_i32_1 = arith.constant 0 : i32
    return %c0_i32, %c0_i32_0 : i32, i32
  }
  func.func @transform_9(%arg0: i32) -> (i32, i32, i32) {
    %c0_i32 = arith.constant 0 : i32
    %c0_i32_0 = arith.constant 0 : i32
    %c0_i32_1 = arith.constant 0 : i32
    return %arg0, %c0_i32, %c0_i32_0 : i32, i32, i32
  }
}

</mosaic_0001>

<llo_original>
// kernel: tpu_custom_call.1
$region0: #{tpu_custom_call.1}
  #allocation0 [shape = 'u32[]', space=smem, size = 0x4, offset = 0x4, fixed_abs, tag = 'smem constant byte address 0x4 - core index']
  #allocation1 [shape = 'u32[144,128]{1,0:T(1,128)}', space=vmem, size = 0x12000, scoped, tag = 'internal scratch']
  #allocation2 [shape = 'f32[1,1]{1,0:T(1,128)S(1)}', space=vmem, size = 0x200, scoped, tag = 'scoped memory for tpu_custom_call.1']
  %s0 = inlined_call_operand.vmem [shape: f32[8,32], index: 0, kind: input, shape index: {}]
  %s1 = inlined_call_operand.vmem [shape: bf16[32,16], index: 1, kind: input, shape index: {}]
  %s2 = inlined_call_operand.vmem [shape: f32[1,16], index: 2, kind: input, shape index: {}]
  %s3 = inlined_call_operand.vmem [shape: bf16[16,8], index: 3, kind: input, shape index: {}]
  %s4 = inlined_call_operand.vmem [shape: f32[1,8], index: 4, kind: input, shape index: {}]
  %s5 = inlined_call_operand.vmem [shape: bf16[8,4], index: 5, kind: input, shape index: {}]
  %s6 = inlined_call_operand.vmem [shape: f32[1,4], index: 6, kind: input, shape index: {}]
  %s7 = inlined_call_operand.vmem [shape: f32[1,4], index: 7, kind: input, shape index: {}]
  %s8 = inlined_call_operand.<no memory space> [shape: f32[1,1], index: 8, kind: input, shape index: {}]
  %s9 = inlined_call_operand.hbm [shape: f32[1,1,8], index: 9, kind: output, shape index: {}]
  %s10 = sld [smem:[#allocation0]]
  $region46: #{tpu_custom_call.1} parent=0
    _
  %s12 = ssub.s32 1, %s10
  %s13 = scalar_select 0, %s12, %s10
  %v14 = vstv %s8
  %15 = vst [vmem:[#allocation2] sm:$0x1] %v14
  $region1: #{tpu_custom_call.1} parent=0
    #allocation3 [shape = 'u8[512]{0}', space=vmem, size = 0x400, scoped, tag = 'output window, operand 0, single buffered']
    #allocation4 [shape = 's32[1]{0}', space=sflag, size = 0x4, scoped, tag = 'scoped memory for tpu_custom_call.1']
    %16 = vsyncpa [#allocation4], 0
    // Predicated region
    $region2: #{tpu_custom_call.1} parent=1 // pred_check
      _
    $region3: #{tpu_custom_call.1} parent=1 // pred_check_branch
      %18 = sbr.rel (0) target = $region5
    $region4: #{tpu_custom_call.1} parent=1 // pred_region
      _
    $region5: #{tpu_custom_call.1} parent=1 // pred_fallthru
      _
    // Predicated region
    $region6: #{tpu_custom_call.1} parent=1 // pred_check
      _
    $region7: #{tpu_custom_call.1} parent=1 // pred_check_branch
      %20 = sbr.rel (0) target = $region9
    $region8: #{tpu_custom_call.1} parent=1 // pred_region
      _
    $region9: #{tpu_custom_call.1} parent=1 // pred_fallthru
      _
    // Predicated region
    $region10: #{tpu_custom_call.1} parent=1 // pred_check
      _
    $region11: #{tpu_custom_call.1} parent=1 // pred_check_branch
      %22 = sbr.rel (0) target = $region13
    $region12: #{tpu_custom_call.1} parent=1 // pred_region
      _
    $region13: #{tpu_custom_call.1} parent=1 // pred_fallthru
      _
    // Predicated region
    $region14: #{tpu_custom_call.1} parent=1 // pred_check
      _
    $region15: #{tpu_custom_call.1} parent=1 // pred_check_branch
      %24 = sbr.rel (0) target = $region17
    $region16: #{tpu_custom_call.1} parent=1 // pred_region
      _
    $region17: #{tpu_custom_call.1} parent=1 // pred_fallthru
      _
    // Predicated region
    $region18: #{tpu_custom_call.1} parent=1 // pred_check
      _
    $region19: #{tpu_custom_call.1} parent=1 // pred_check_branch
      %26 = sbr.rel (0) target = $region21
    $region20: #{tpu_custom_call.1} parent=1 // pred_region
      _
    $region21: #{tpu_custom_call.1} parent=1 // pred_fallthru
      _
    // Predicated region
    $region22: #{tpu_custom_call.1} parent=1 // pred_check
      _
    $region23: #{tpu_custom_call.1} parent=1 // pred_check_branch
      %28 = sbr.rel (0) target = $region25
    $region24: #{tpu_custom_call.1} parent=1 // pred_region
      _
    $region25: #{tpu_custom_call.1} parent=1 // pred_fallthru
      _
    // Predicated region
    $region26: #{tpu_custom_call.1} parent=1 // pred_check
      _
    $region27: #{tpu_custom_call.1} parent=1 // pred_check_branch
      %30 = sbr.rel (0) target = $region29
    $region28: #{tpu_custom_call.1} parent=1 // pred_region
      _
    $region29: #{tpu_custom_call.1} parent=1 // pred_fallthru
      _
    // Predicated region
    $region30: #{tpu_custom_call.1} parent=1 // pred_check
      _
    $region31: #{tpu_custom_call.1} parent=1 // pred_check_branch
      %32 = sbr.rel (0) target = $region33
    $region32: #{tpu_custom_call.1} parent=1 // pred_region
      _
    $region33: #{tpu_custom_call.1} parent=1 // pred_fallthru
      _
    // Predicated region
    $region34: #{tpu_custom_call.1} parent=1 // pred_check
      _
    $region35: #{tpu_custom_call.1} parent=1 // pred_check_branch
      %34 = sbr.rel (0) target = $region37
    $region36: #{tpu_custom_call.1} parent=1 // pred_region
      _
    $region37: #{tpu_custom_call.1} parent=1 // pred_fallthru
      _
    %v36 = vld [vmem:[%s0] sm:$0xff]
    %v37 = vpack.c.bf16 %v36, %v36
    %v38 = vld [vmem:[%s1] sm:$0xf]
    %v39 = vld [vmem:[%s1 + $0x4] sm:$0xf]
    %v40 = vld [vmem:[%s1 + $0x8] sm:$0xf]
    %v41 = vld [vmem:[%s1 + $0xc] sm:$0xf]
    %v42 = vld [vmem:[%s2] sm:$0x1]
    %v44 = vlaneseq
    %v45 = vshrl.u32 %v44, 7
    %v46 = vsub.s32 0, %v45
    %v47 = vrot.slane %v42, %v46
    %v53 = vunpack.c.l.b16 %v38
    %v54 = vunpack.c.l.b16 %v39
    %v55 = vunpack.c.l.b16 %v40
    %v56 = vunpack.c.l.b16 %v41
    %v57 = vpack.c.b16 %v54, %v53
    %v58 = vpack.c.b16 %v56, %v55
    %vm61 = vcmask 261120
    %v63 = vsel %vm61, %v37, 0
    %65 = vmatprep.subr.bf16.mxu0 0
    %66 = vmatpush1.bf16.msra.mxu0 %v57
    %67 = vmatprep.subr.bf16.mxu0 0
    %68 = vmatpush1.bf16.msra.mxu0 %v58
    %69 = vmatprep.subr.bf16.mxu0 0
    %70 = vmatpush1.bf16.msra.mxu0 0
    %71 = vmatprep.subr.bf16.mxu0 0
    %72 = vmatpush1.bf16.msra.mxu0 0
    %73 = vmatprep.subr.bf16.mxu0 0
    %74 = vmatpush1.bf16.msra.mxu0 0
    %75 = vmatprep.subr.bf16.mxu0 0
    %76 = vmatpush1.bf16.msra.mxu0 0
    %77 = vmatprep.subr.bf16.mxu0 0
    %78 = vmatpush1.bf16.msra.mxu0 0
    %79 = vmatprep.subr.bf16.mxu0 0
    %80 = vmatpush1.bf16.msra.mxu0 0
    %81 = vmatprep.subr.bf16.mxu0 0
    %82 = vmatpush1.bf16.msra.mxu0 0
    %83 = vmatprep.subr.bf16.mxu0 0
    %84 = vmatpush1.bf16.msra.mxu0 0
    %85 = vmatprep.subr.bf16.mxu0 0
    %86 = vmatpush1.bf16.msra.mxu0 0
    %87 = vmatprep.subr.bf16.mxu0 0
    %88 = vmatpush1.bf16.msra.mxu0 0
    %89 = vmatprep.subr.bf16.mxu0 0
    %90 = vmatpush1.bf16.msra.mxu0 0
    %91 = vmatprep.subr.bf16.mxu0 0
    %92 = vmatpush1.bf16.msra.mxu0 0
    %93 = vmatprep.subr.bf16.mxu0 0
    %94 = vmatpush1.bf16.msra.mxu0 0
    %95 = vmatprep.subr.bf16.mxu0 0
    %96 = vmatpush1.bf16.msra.mxu0 0
    %97 = vmatprep.mubr.bf16.mxu0 0
    %98 = vmatmul.mubr.bf16.gmra.mrb[0].mxu0 %v63
    %v99 = vpop.f32.mrb[0].mxu0
    %v100 = vadd.f32 %v47, %v99
    %v101 = vpop.f32.mrb[0].mxu0
    %v102 = vpop.f32.mrb[0].mxu0
    %v103 = vpop.f32.mrb[0].mxu0
    %104 = vdwg.mxu0
    %v105 = vmax.f32 %v100, 0.0
    %v106 = vpack.c.bf16 %v105, %v105
    %v107 = vld [vmem:[%s3] sm:$0xf]
    %v108 = vld [vmem:[%s3 + $0x4] sm:$0xf]
    %v109 = vld [vmem:[%s4] sm:$0x1]
    %v111 = vlaneseq
    %v112 = vshrl.u32 %v111, 7
    %v113 = vsub.s32 0, %v112
    %v114 = vrot.slane %v109, %v113
    %v118 = vunpack.c.l.b16 %v107
    %v119 = vunpack.c.l.b16 %v108
    %v120 = vpack.c.b16 %v119, %v118
    %vm122 = vcmask 130048
    %v124 = vsel %vm122, %v106, 0
    %126 = vmatprep.subr.bf16.mxu0 0
    %127 = vmatpush1.bf16.msra.mxu0 %v120
    %128 = vmatprep.subr.bf16.mxu0 0
    %129 = vmatpush1.bf16.msra.mxu0 0
    %130 = vmatprep.subr.bf16.mxu0 0
    %131 = vmatpush1.bf16.msra.mxu0 0
    %132 = vmatprep.subr.bf16.mxu0 0
    %133 = vmatpush1.bf16.msra.mxu0 0
    %134 = vmatprep.subr.bf16.mxu0 0
    %135 = vmatpush1.bf16.msra.mxu0 0
    %136 = vmatprep.subr.bf16.mxu0 0
    %137 = vmatpush1.bf16.msra.mxu0 0
    %138 = vmatprep.subr.bf16.mxu0 0
    %139 = vmatpush1.bf16.msra.mxu0 0
    %140 = vmatprep.subr.bf16.mxu0 0
    %141 = vmatpush1.bf16.msra.mxu0 0
    %142 = vmatprep.subr.bf16.mxu0 0
    %143 = vmatpush1.bf16.msra.mxu0 0
    %144 = vmatprep.subr.bf16.mxu0 0
    %145 = vmatpush1.bf16.msra.mxu0 0
    %146 = vmatprep.subr.bf16.mxu0 0
    %147 = vmatpush1.bf16.msra.mxu0 0
    %148 = vmatprep.subr.bf16.mxu0 0
    %149 = vmatpush1.bf16.msra.mxu0 0
    %150 = vmatprep.subr.bf16.mxu0 0
    %151 = vmatpush1.bf16.msra.mxu0 0
    %152 = vmatprep.subr.bf16.mxu0 0
    %153 = vmatpush1.bf16.msra.mxu0 0
    %154 = vmatprep.subr.bf16.mxu0 0
    %155 = vmatpush1.bf16.msra.mxu0 0
    %156 = vmatprep.subr.bf16.mxu0 0
    %157 = vmatpush1.bf16.msra.mxu0 0
    %158 = vmatprep.mubr.bf16.mxu0 0
    %159 = vmatmul.mubr.bf16.gmra.mrb[0].mxu0 %v124
    %v160 = vpop.f32.mrb[0].mxu0
    %v161 = vadd.f32 %v114, %v160
    %v162 = vpop.f32.mrb[0].mxu0
    %v163 = vpop.f32.mrb[0].mxu0
    %v164 = vpop.f32.mrb[0].mxu0
    %165 = vdwg.mxu0
    %v166 = vmax.f32 %v161, 0.0
    %v167 = vpack.c.bf16 %v166, %v166
    %v168 = vld [vmem:[%s5] sm:$0xf]
    %v169 = vld [vmem:[%s6] sm:$0x1]
    %v171 = vlaneseq
    %v172 = vshrl.u32 %v171, 7
    %v173 = vsub.s32 0, %v172
    %v174 = vrot.slane %v169, %v173
    %vm176 = vcmask 64512
    %v178 = vsel %vm176, %v167, 0
    %vm180 = vcmask 1043456
    %v182 = vsel %vm180, %v168, 0
    %184 = vmatprep.subr.bf16.mxu0 0
    %185 = vmatpush1.bf16.msra.mxu0 %v182
    %186 = vmatprep.subr.bf16.mxu0 0
    %187 = vmatpush1.bf16.msra.mxu0 0
    %188 = vmatprep.subr.bf16.mxu0 0
    %189 = vmatpush1.bf16.msra.mxu0 0
    %190 = vmatprep.subr.bf16.mxu0 0
    %191 = vmatpush1.bf16.msra.mxu0 0
    %192 = vmatprep.subr.bf16.mxu0 0
    %193 = vmatpush1.bf16.msra.mxu0 0
    %194 = vmatprep.subr.bf16.mxu0 0
    %195 = vmatpush1.bf16.msra.mxu0 0
    %196 = vmatprep.subr.bf16.mxu0 0
    %197 = vmatpush1.bf16.msra.mxu0 0
    %198 = vmatprep.subr.bf16.mxu0 0
    %199 = vmatpush1.bf16.msra.mxu0 0
    %200 = vmatprep.subr.bf16.mxu0 0
    %201 = vmatpush1.bf16.msra.mxu0 0
    %202 = vmatprep.subr.bf16.mxu0 0
    %203 = vmatpush1.bf16.msra.mxu0 0
    %204 = vmatprep.subr.bf16.mxu0 0
    %205 = vmatpush1.bf16.msra.mxu0 0
    %206 = vmatprep.subr.bf16.mxu0 0
    %207 = vmatpush1.bf16.msra.mxu0 0
    %208 = vmatprep.subr.bf16.mxu0 0
    %209 = vmatpush1.bf16.msra.mxu0 0
    %210 = vmatprep.subr.bf16.mxu0 0
    %211 = vmatpush1.bf16.msra.mxu0 0
    %212 = vmatprep.subr.bf16.mxu0 0
    %213 = vmatpush1.bf16.msra.mxu0 0
    %214 = vmatprep.subr.bf16.mxu0 0
    %215 = vmatpush1.bf16.msra.mxu0 0
    %216 = vmatprep.mubr.bf16.mxu0 0
    %217 = vmatmul.mubr.bf16.gmra.mrb[0].mxu0 %v178
    %v218 = vpop.f32.mrb[0].mxu0
    %v219 = vadd.f32 %v174, %v218
    %v220 = vpop.f32.mrb[0].mxu0
    %v221 = vpop.f32.mrb[0].mxu0
    %v222 = vpop.f32.mrb[0].mxu0
    %223 = vdwg.mxu0
    %v224 = vmax.f32 %v219, 0.0
    %v225 = vld [vmem:[%s7] sm:$0x1]
    %v226 = vld [vmem:[#allocation2] sm:$0x1]
    %228 = vset.pattern.permute.xlu0 0
    %229 = vperm.xlu0 %228, %v226
    %v230 = vpop.permute.xlu0 %229
    %v232 = vlaneseq
    %v233 = vshrl.u32 %v232, 7
    %v234 = vsub.s32 0, %v233
    %v235 = vrot.slane %v230, %v234
    %vm236 = vcmask 31744
    %v238 = vsel %vm236, %v225, 0
    %v241 = vsel %vm236, %v224, 0
    %243 = vmatprep.subr.mxu0 0.0
    %244 = vmatpush1.xpose.msra.mxu0 %v241
    %245 = vmatprep.subr.mxu0 0.0
    %246 = vmatpush1.xpose.msra.mxu0 0.0
    %247 = vmatprep.subr.mxu0 0.0
    %248 = vmatpush1.xpose.msra.mxu0 0.0
    %249 = vmatprep.subr.mxu0 0.0
    %250 = vmatpush1.xpose.msra.mxu0 0.0
    %251 = vmatprep.subr.mxu0 0.0
    %252 = vmatpush1.xpose.msra.mxu0 0.0
    %253 = vmatprep.subr.mxu0 0.0
    %254 = vmatpush1.xpose.msra.mxu0 0.0
    %255 = vmatprep.subr.mxu0 0.0
    %256 = vmatpush1.xpose.msra.mxu0 0.0
    %257 = vmatprep.subr.mxu0 0.0
    %258 = vmatpush1.xpose.msra.mxu0 0.0
    %259 = vmatprep.subr.mxu0 0.0
    %260 = vmatpush1.xpose.msra.mxu0 0.0
    %261 = vmatprep.subr.mxu0 0.0
    %262 = vmatpush1.xpose.msra.mxu0 0.0
    %263 = vmatprep.subr.mxu0 0.0
    %264 = vmatpush1.xpose.msra.mxu0 0.0
    %265 = vmatprep.subr.mxu0 0.0
    %266 = vmatpush1.xpose.msra.mxu0 0.0
    %267 = vmatprep.subr.mxu0 0.0
    %268 = vmatpush1.xpose.msra.mxu0 0.0
    %269 = vmatprep.subr.mxu0 0.0
    %270 = vmatpush1.xpose.msra.mxu0 0.0
    %271 = vmatprep.subr.mxu0 0.0
    %272 = vmatpush1.xpose.msra.mxu0 0.0
    %273 = vmatprep.subr.mxu0 0.0
    %274 = vmatpush1.xpose.msra.mxu0 0.0
    %275 = vmatprep.subr.mxu0 0.0
    %276 = vmatpush1.xpose.msra.mxu0 0.0
    %277 = vmatprep.subr.mxu0 0.0
    %278 = vmatpush1.xpose.msra.mxu0 0.0
    %279 = vmatprep.subr.mxu0 0.0
    %280 = vmatpush1.xpose.msra.mxu0 0.0
    %281 = vmatprep.subr.mxu0 0.0
    %282 = vmatpush1.xpose.msra.mxu0 0.0
    %283 = vmatprep.subr.mxu0 0.0
    %284 = vmatpush1.xpose.msra.mxu0 0.0
    %285 = vmatprep.subr.mxu0 0.0
    %286 = vmatpush1.xpose.msra.mxu0 0.0
    %287 = vmatprep.subr.mxu0 0.0
    %288 = vmatpush1.xpose.msra.mxu0 0.0
    %289 = vmatprep.subr.mxu0 0.0
    %290 = vmatpush1.xpose.msra.mxu0 0.0
    %291 = vmatprep.subr.mxu0 0.0
    %292 = vmatpush1.xpose.msra.mxu0 0.0
    %293 = vmatprep.subr.mxu0 0.0
    %294 = vmatpush1.xpose.msra.mxu0 0.0
    %295 = vmatprep.subr.mxu0 0.0
    %296 = vmatpush1.xpose.msra.mxu0 0.0
    %297 = vmatprep.subr.mxu0 0.0
    %298 = vmatpush1.xpose.msra.mxu0 0.0
    %299 = vmatprep.subr.mxu0 0.0
    %300 = vmatpush1.xpose.msra.mxu0 0.0
    %301 = vmatprep.subr.mxu0 0.0
    %302 = vmatpush1.xpose.msra.mxu0 0.0
    %303 = vmatprep.subr.mxu0 0.0
    %304 = vmatpush1.xpose.msra.mxu0 0.0
    %305 = vmatprep.subr.mxu0 0.0
    %306 = vmatpush1.xpose.msra.mxu0 0.0
    %307 = vmatprep.mubr.f32.mxu0 0.0
    %308 = vmatmul.mubr.f32.gmra.mrb[0].mxu0 %v238
    %v309 = vpop.f32.mrb[0].mxu0
    %v310 = vadd.f32 %v235, %v309
    %v311 = vpop.f32.mrb[0].mxu0
    %312 = vdwg.mxu0
    %vm313 = vcmask 57344
    %314 = vst.msk [vmem:[#allocation3] sm:$0x1] %vm313, %v310
    // Predicated region
    $region38: #{tpu_custom_call.1} parent=1 // pred_check
      _
    $region39: #{tpu_custom_call.1} parent=1 // pred_check_branch
      %316 = sbr.rel (0) target = $region41
    $region40: #{tpu_custom_call.1} parent=1 // pred_region
      %s318 = ssub.s32 16, 16
      %319 = vsyncadd [#allocation4], %s318
      %s321 = sshll.u32 [#allocation3], 4
      %s322 = int_to_ptr.vmem [resolvable:$true] %s321
      %324 = dma.vmem_to_hbm [thread:$0]  %s322, 16, %s9, [#allocation4]
    $region41: #{tpu_custom_call.1} parent=1 // pred_fallthru
      _
    // Predicated region
    $region42: #{tpu_custom_call.1} parent=1 // pred_check
      _
    $region43: #{tpu_custom_call.1} parent=1 // pred_check_branch
      %326 = sbr.rel (0) target = $region45
    $region44: #{tpu_custom_call.1} parent=1 // pred_region
      %327 = dma.done [#allocation4], 16
    $region45: #{tpu_custom_call.1} parent=1 // pred_fallthru
      _
    %328 = vsyncpa [#allocation4], 1

// kernel: tpu_custom_call.1
$region0: #{tpu_custom_call.1}
  #allocation0 [shape = 'u32[]', space=smem, size = 0x4, offset = 0x4, fixed_abs, tag = 'smem constant byte address 0x4 - core index']
  #allocation1 [shape = 'u32[144,128]{1,0:T(1,128)}', space=vmem, size = 0x12000, scoped, tag = 'internal scratch']
  #allocation2 [shape = 'f32[1,1]{1,0:T(1,128)S(1)}', space=vmem, size = 0x200, scoped, tag = 'scoped memory for tpu_custom_call.1']
  %s0 = inlined_call_operand.vmem [shape: f32[8,32], index: 0, kind: input, shape index: {}]
  %s1 = inlined_call_operand.vmem [shape: bf16[32,16], index: 1, kind: input, shape index: {}]
  %s2 = inlined_call_operand.vmem [shape: f32[1,16], index: 2, kind: input, shape index: {}]
  %s3 = inlined_call_operand.vmem [shape: bf16[16,8], index: 3, kind: input, shape index: {}]
  %s4 = inlined_call_operand.vmem [shape: f32[1,8], index: 4, kind: input, shape index: {}]
  %s5 = inlined_call_operand.vmem [shape: bf16[8,4], index: 5, kind: input, shape index: {}]
  %s6 = inlined_call_operand.vmem [shape: f32[1,4], index: 6, kind: input, shape index: {}]
  %s7 = inlined_call_operand.vmem [shape: f32[1,4], index: 7, kind: input, shape index: {}]
  %s8 = inlined_call_operand.<no memory space> [shape: f32[1,1], index: 8, kind: input, shape index: {}]
  %s9 = inlined_call_operand.hbm [shape: f32[1,1,8], index: 9, kind: output, shape index: {}]
  %s10 = sld [smem:[#allocation0]]
  $region46: #{tpu_custom_call.1} parent=0
    _
  %s12 = ssub.s32 1, %s10
  %s13 = scalar_select 0, %s12, %s10
  %v14 = vstv %s8
  %15 = vst [vmem:[#allocation2] sm:$0x1] %v14
  $region1: #{tpu_custom_call.1} parent=0
    #allocation3 [shape = 'u8[512]{0}', space=vmem, size = 0x400, scoped, tag = 'output window, operand 0, single buffered']
    #allocation4 [shape = 's32[1]{0}', space=sflag, size = 0x4, scoped, tag = 'scoped memory for tpu_custom_call.1']
    %16 = vsyncpa [#allocation4], 0
    // Predicated region
    $region2: #{tpu_custom_call.1} parent=1 // pred_check
      _
    $region3: #{tpu_custom_call.1} parent=1 // pred_check_branch
      %18 = sbr.rel (0) target = $region5
    $region4: #{tpu_custom_call.1} parent=1 // pred_region
      _
    $region5: #{tpu_custom_call.1} parent=1 // pred_fallthru
      _
    // Predicated region
    $region6: #{tpu_custom_call.1} parent=1 // pred_check
      _
    $region7: #{tpu_custom_call.1} parent=1 // pred_check_branch
      %20 = sbr.rel (0) target = $region9
    $region8: #{tpu_custom_call.1} parent=1 // pred_region
      _
    $region9: #{tpu_custom_call.1} parent=1 // pred_fallthru
      _
    // Predicated region
    $region10: #{tpu_custom_call.1} parent=1 // pred_check
      _
    $region11: #{tpu_custom_call.1} parent=1 // pred_check_branch
      %22 = sbr.rel (0) target = $region13
    $region12: #{tpu_custom_call.1} parent=1 // pred_region
      _
    $region13: #{tpu_custom_call.1} parent=1 // pred_fallthru
      _
    // Predicated region
    $region14: #{tpu_custom_call.1} parent=1 // pred_check
      _
    $region15: #{tpu_custom_call.1} parent=1 // pred_check_branch
      %24 = sbr.rel (0) target = $region17
    $region16: #{tpu_custom_call.1} parent=1 // pred_region
      _
    $region17: #{tpu_custom_call.1} parent=1 // pred_fallthru
      _
    // Predicated region
    $region18: #{tpu_custom_call.1} parent=1 // pred_check
      _
    $region19: #{tpu_custom_call.1} parent=1 // pred_check_branch
      %26 = sbr.rel (0) target = $region21
    $region20: #{tpu_custom_call.1} parent=1 // pred_region
      _
    $region21: #{tpu_custom_call.1} parent=1 // pred_fallthru
      _
    // Predicated region
    $region22: #{tpu_custom_call.1} parent=1 // pred_check
      _
    $region23: #{tpu_custom_call.1} parent=1 // pred_check_branch
      %28 = sbr.rel (0) target = $region25
    $region24: #{tpu_custom_call.1} parent=1 // pred_region
      _
    $region25: #{tpu_custom_call.1} parent=1 // pred_fallthru
      _
    // Predicated region
    $region26: #{tpu_custom_call.1} parent=1 // pred_check
      _
    $region27: #{tpu_custom_call.1} parent=1 // pred_check_branch
      %30 = sbr.rel (0) target = $region29
    $region28: #{tpu_custom_call.1} parent=1 // pred_region
      _
    $region29: #{tpu_custom_call.1} parent=1 // pred_fallthru
      _
    // Predicated region
    $region30: #{tpu_custom_call.1} parent=1 // pred_check
      _
    $region31: #{tpu_custom_call.1} parent=1 // pred_check_branch
      %32 = sbr.rel (0) target = $region33
    $region32: #{tpu_custom_call.1} parent=1 // pred_region
      _
    $region33: #{tpu_custom_call.1} parent=1 // pred_fallthru
      _
    // Predicated region
    $region34: #{tpu_custom_call.1} parent=1 // pred_check
      _
    $region35: #{tpu_custom_call.1} parent=1 // pred_check_branch
      %34 = sbr.rel (0) target = $region37
    $region36: #{tpu_custom_call.1} parent=1 // pred_region
      _
    $region37: #{tpu_custom_call.1} parent=1 // pred_fallthru
      _
    %v36 = vld [vmem:[%s0] sm:$0xff]
    %v37 = vpack.c.bf16 %v36, %v36
    %v38 = vld [vmem:[%s1] sm:$0xf]
    %v39 = vld [vmem:[%s1 + $0x4] sm:$0xf]
    %v40 = vld [vmem:[%s1 + $0x8] sm:$0xf]
    %v41 = vld [vmem:[%s1 + $0xc] sm:$0xf]
    %v42 = vld [vmem:[%s2] sm:$0x1]
    %v44 = vlaneseq
    %v45 = vshrl.u32 %v44, 7
    %v46 = vsub.s32 0, %v45
    %v47 = vrot.slane %v42, %v46
    %v53 = vunpack.c.l.b16 %v38
    %v54 = vunpack.c.l.b16 %v39
    %v55 = vunpack.c.l.b16 %v40
    %v56 = vunpack.c.l.b16 %v41
    %v57 = vpack.c.b16 %v54, %v53
    %v58 = vpack.c.b16 %v56, %v55
    %vm61 = vcmask 261120
    %v63 = vsel %vm61, %v37, 0
    %65 = vmatprep.subr.bf16.mxu0 0
    %66 = vmatpush1.bf16.msra.mxu0 %v57
    %67 = vmatprep.subr.bf16.mxu0 0
    %68 = vmatpush1.bf16.msra.mxu0 %v58
    %69 = vmatprep.subr.bf16.mxu0 0
    %70 = vmatpush1.bf16.msra.mxu0 0
    %71 = vmatprep.subr.bf16.mxu0 0
    %72 = vmatpush1.bf16.msra.mxu0 0
    %73 = vmatprep.subr.bf16.mxu0 0
    %74 = vmatpush1.bf16.msra.mxu0 0
    %75 = vmatprep.subr.bf16.mxu0 0
    %76 = vmatpush1.bf16.msra.mxu0 0
    %77 = vmatprep.subr.bf16.mxu0 0
    %78 = vmatpush1.bf16.msra.mxu0 0
    %79 = vmatprep.subr.bf16.mxu0 0
    %80 = vmatpush1.bf16.msra.mxu0 0
    %81 = vmatprep.subr.bf16.mxu0 0
    %82 = vmatpush1.bf16.msra.mxu0 0
    %83 = vmatprep.subr.bf16.mxu0 0
    %84 = vmatpush1.bf16.msra.mxu0 0
    %85 = vmatprep.subr.bf16.mxu0 0
    %86 = vmatpush1.bf16.msra.mxu0 0
    %87 = vmatprep.subr.bf16.mxu0 0
    %88 = vmatpush1.bf16.msra.mxu0 0
    %89 = vmatprep.subr.bf16.mxu0 0
    %90 = vmatpush1.bf16.msra.mxu0 0
    %91 = vmatprep.subr.bf16.mxu0 0
    %92 = vmatpush1.bf16.msra.mxu0 0
    %93 = vmatprep.subr.bf16.mxu0 0
    %94 = vmatpush1.bf16.msra.mxu0 0
    %95 = vmatprep.subr.bf16.mxu0 0
    %96 = vmatpush1.bf16.msra.mxu0 0
    %97 = vmatprep.mubr.bf16.mxu0 0
    %98 = vmatmul.mubr.bf16.gmra.mrb[0].mxu0 %v63
    %v99 = vpop.f32.mrb[0].mxu0
    %v100 = vadd.f32 %v47, %v99
    %v101 = vpop.f32.mrb[0].mxu0
    %v102 = vpop.f32.mrb[0].mxu0
    %v103 = vpop.f32.mrb[0].mxu0
    %104 = vdwg.mxu0
    %v105 = vmax.f32 %v100, 0.0
    %v106 = vpack.c.bf16 %v105, %v105
    %v107 = vld [vmem:[%s3] sm:$0xf]
    %v108 = vld [vmem:[%s3 + $0x4] sm:$0xf]
    %v109 = vld [vmem:[%s4] sm:$0x1]
    %v111 = vlaneseq
    %v112 = vshrl.u32 %v111, 7
    %v113 = vsub.s32 0, %v112
    %v114 = vrot.slane %v109, %v113
    %v118 = vunpack.c.l.b16 %v107
    %v119 = vunpack.c.l.b16 %v108
    %v120 = vpack.c.b16 %v119, %v118
    %vm122 = vcmask 130048
    %v124 = vsel %vm122, %v106, 0
    %126 = vmatprep.subr.bf16.mxu0 0
    %127 = vmatpush1.bf16.msra.mxu0 %v120
    %128 = vmatprep.subr.bf16.mxu0 0
    %129 = vmatpush1.bf16.msra.mxu0 0
    %130 = vmatprep.subr.bf16.mxu0 0
    %131 = vmatpush1.bf16.msra.mxu0 0
    %132 = vmatprep.subr.bf16.mxu0 0
    %133 = vmatpush1.bf16.msra.mxu0 0
    %134 = vmatprep.subr.bf16.mxu0 0
    %135 = vmatpush1.bf16.msra.mxu0 0
    %136 = vmatprep.subr.bf16.mxu0 0
    %137 = vmatpush1.bf16.msra.mxu0 0
    %138 = vmatprep.subr.bf16.mxu0 0
    %139 = vmatpush1.bf16.msra.mxu0 0
    %140 = vmatprep.subr.bf16.mxu0 0
    %141 = vmatpush1.bf16.msra.mxu0 0
    %142 = vmatprep.subr.bf16.mxu0 0
    %143 = vmatpush1.bf16.msra.mxu0 0
    %144 = vmatprep.subr.bf16.mxu0 0
    %145 = vmatpush1.bf16.msra.mxu0 0
    %146 = vmatprep.subr.bf16.mxu0 0
    %147 = vmatpush1.bf16.msra.mxu0 0
    %148 = vmatprep.subr.bf16.mxu0 0
    %149 = vmatpush1.bf16.msra.mxu0 0
    %150 = vmatprep.subr.bf16.mxu0 0
    %151 = vmatpush1.bf16.msra.mxu0 0
    %152 = vmatprep.subr.bf16.mxu0 0
    %153 = vmatpush1.bf16.msra.mxu0 0
    %154 = vmatprep.subr.bf16.mxu0 0
    %155 = vmatpush1.bf16.msra.mxu0 0
    %156 = vmatprep.subr.bf16.mxu0 0
    %157 = vmatpush1.bf16.msra.mxu0 0
    %158 = vmatprep.mubr.bf16.mxu0 0
    %159 = vmatmul.mubr.bf16.gmra.mrb[0].mxu0 %v124
    %v160 = vpop.f32.mrb[0].mxu0
    %v161 = vadd.f32 %v114, %v160
    %v162 = vpop.f32.mrb[0].mxu0
    %v163 = vpop.f32.mrb[0].mxu0
    %v164 = vpop.f32.mrb[0].mxu0
    %165 = vdwg.mxu0
    %v166 = vmax.f32 %v161, 0.0
    %v167 = vpack.c.bf16 %v166, %v166
    %v168 = vld [vmem:[%s5] sm:$0xf]
    %v169 = vld [vmem:[%s6] sm:$0x1]
    %v171 = vlaneseq
    %v172 = vshrl.u32 %v171, 7
    %v173 = vsub.s32 0, %v172
    %v174 = vrot.slane %v169, %v173
    %vm176 = vcmask 64512
    %v178 = vsel %vm176, %v167, 0
    %vm180 = vcmask 1043456
    %v182 = vsel %vm180, %v168, 0
    %184 = vmatprep.subr.bf16.mxu0 0
    %185 = vmatpush1.bf16.msra.mxu0 %v182
    %186 = vmatprep.subr.bf16.mxu0 0
    %187 = vmatpush1.bf16.msra.mxu0 0
    %188 = vmatprep.subr.bf16.mxu0 0
    %189 = vmatpush1.bf16.msra.mxu0 0
    %190 = vmatprep.subr.bf16.mxu0 0
    %191 = vmatpush1.bf16.msra.mxu0 0
    %192 = vmatprep.subr.bf16.mxu0 0
    %193 = vmatpush1.bf16.msra.mxu0 0
    %194 = vmatprep.subr.bf16.mxu0 0
    %195 = vmatpush1.bf16.msra.mxu0 0
    %196 = vmatprep.subr.bf16.mxu0 0
    %197 = vmatpush1.bf16.msra.mxu0 0
    %198 = vmatprep.subr.bf16.mxu0 0
    %199 = vmatpush1.bf16.msra.mxu0 0
    %200 = vmatprep.subr.bf16.mxu0 0
    %201 = vmatpush1.bf16.msra.mxu0 0
    %202 = vmatprep.subr.bf16.mxu0 0
    %203 = vmatpush1.bf16.msra.mxu0 0
    %204 = vmatprep.subr.bf16.mxu0 0
    %205 = vmatpush1.bf16.msra.mxu0 0
    %206 = vmatprep.subr.bf16.mxu0 0
    %207 = vmatpush1.bf16.msra.mxu0 0
    %208 = vmatprep.subr.bf16.mxu0 0
    %209 = vmatpush1.bf16.msra.mxu0 0
    %210 = vmatprep.subr.bf16.mxu0 0
    %211 = vmatpush1.bf16.msra.mxu0 0
    %212 = vmatprep.subr.bf16.mxu0 0
    %213 = vmatpush1.bf16.msra.mxu0 0
    %214 = vmatprep.subr.bf16.mxu0 0
    %215 = vmatpush1.bf16.msra.mxu0 0
    %216 = vmatprep.mubr.bf16.mxu0 0
    %217 = vmatmul.mubr.bf16.gmra.mrb[0].mxu0 %v178
    %v218 = vpop.f32.mrb[0].mxu0
    %v219 = vadd.f32 %v174, %v218
    %v220 = vpop.f32.mrb[0].mxu0
    %v221 = vpop.f32.mrb[0].mxu0
    %v222 = vpop.f32.mrb[0].mxu0
    %223 = vdwg.mxu0
    %v224 = vmax.f32 %v219, 0.0
    %v225 = vld [vmem:[%s7] sm:$0x1]
    %v226 = vld [vmem:[#allocation2] sm:$0x1]
    %228 = vset.pattern.permute.xlu0 0
    %229 = vperm.xlu0 %228, %v226
    %v230 = vpop.permute.xlu0 %229
    %v232 = vlaneseq
    %v233 = vshrl.u32 %v232, 7
    %v234 = vsub.s32 0, %v233
    %v235 = vrot.slane %v230, %v234
    %vm236 = vcmask 31744
    %v238 = vsel %vm236, %v225, 0
    %v241 = vsel %vm236, %v224, 0
    %243 = vmatprep.subr.mxu0 0.0
    %244 = vmatpush1.xpose.msra.mxu0 %v241
    %245 = vmatprep.subr.mxu0 0.0
    %246 = vmatpush1.xpose.msra.mxu0 0.0
    %247 = vmatprep.subr.mxu0 0.0
    %248 = vmatpush1.xpose.msra.mxu0 0.0
    %249 = vmatprep.subr.mxu0 0.0
    %250 = vmatpush1.xpose.msra.mxu0 0.0
    %251 = vmatprep.subr.mxu0 0.0
    %252 = vmatpush1.xpose.msra.mxu0 0.0
    %253 = vmatprep.subr.mxu0 0.0
    %254 = vmatpush1.xpose.msra.mxu0 0.0
    %255 = vmatprep.subr.mxu0 0.0
    %256 = vmatpush1.xpose.msra.mxu0 0.0
    %257 = vmatprep.subr.mxu0 0.0
    %258 = vmatpush1.xpose.msra.mxu0 0.0
    %259 = vmatprep.subr.mxu0 0.0
    %260 = vmatpush1.xpose.msra.mxu0 0.0
    %261 = vmatprep.subr.mxu0 0.0
    %262 = vmatpush1.xpose.msra.mxu0 0.0
    %263 = vmatprep.subr.mxu0 0.0
    %264 = vmatpush1.xpose.msra.mxu0 0.0
    %265 = vmatprep.subr.mxu0 0.0
    %266 = vmatpush1.xpose.msra.mxu0 0.0
    %267 = vmatprep.subr.mxu0 0.0
    %268 = vmatpush1.xpose.msra.mxu0 0.0
    %269 = vmatprep.subr.mxu0 0.0
    %270 = vmatpush1.xpose.msra.mxu0 0.0
    %271 = vmatprep.subr.mxu0 0.0
    %272 = vmatpush1.xpose.msra.mxu0 0.0
    %273 = vmatprep.subr.mxu0 0.0
    %274 = vmatpush1.xpose.msra.mxu0 0.0
    %275 = vmatprep.subr.mxu0 0.0
    %276 = vmatpush1.xpose.msra.mxu0 0.0
    %277 = vmatprep.subr.mxu0 0.0
    %278 = vmatpush1.xpose.msra.mxu0 0.0
    %279 = vmatprep.subr.mxu0 0.0
    %280 = vmatpush1.xpose.msra.mxu0 0.0
    %281 = vmatprep.subr.mxu0 0.0
    %282 = vmatpush1.xpose.msra.mxu0 0.0
    %283 = vmatprep.subr.mxu0 0.0
    %284 = vmatpush1.xpose.msra.mxu0 0.0
    %285 = vmatprep.subr.mxu0 0.0
    %286 = vmatpush1.xpose.msra.mxu0 0.0
    %287 = vmatprep.subr.mxu0 0.0
    %288 = vmatpush1.xpose.msra.mxu0 0.0
    %289 = vmatprep.subr.mxu0 0.0
    %290 = vmatpush1.xpose.msra.mxu0 0.0
    %291 = vmatprep.subr.mxu0 0.0
    %292 = vmatpush1.xpose.msra.mxu0 0.0
    %293 = vmatprep.subr.mxu0 0.0
    %294 = vmatpush1.xpose.msra.mxu0 0.0
    %295 = vmatprep.subr.mxu0 0.0
    %296 = vmatpush1.xpose.msra.mxu0 0.0
    %297 = vmatprep.subr.mxu0 0.0
    %298 = vmatpush1.xpose.msra.mxu0 0.0
    %299 = vmatprep.subr.mxu0 0.0
    %300 = vmatpush1.xpose.msra.mxu0 0.0
    %301 = vmatprep.subr.mxu0 0.0
    %302 = vmatpush1.xpose.msra.mxu0 0.0
    %303 = vmatprep.subr.mxu0 0.0
    %304 = vmatpush1.xpose.msra.mxu0 0.0
    %305 = vmatprep.subr.mxu0 0.0
    %306 = vmatpush1.xpose.msra.mxu0 0.0
    %307 = vmatprep.mubr.f32.mxu0 0.0
    %308 = vmatmul.mubr.f32.gmra.mrb[0].mxu0 %v238
    %v309 = vpop.f32.mrb[0].mxu0
    %v310 = vadd.f32 %v235, %v309
    %v311 = vpop.f32.mrb[0].mxu0
    %312 = vdwg.mxu0
    %vm313 = vcmask 57344
    %314 = vst.msk [vmem:[#allocation3] sm:$0x1] %vm313, %v310
    // Predicated region
    $region38: #{tpu_custom_call.1} parent=1 // pred_check
      _
    $region39: #{tpu_custom_call.1} parent=1 // pred_check_branch
      %316 = sbr.rel (0) target = $region41
    $region40: #{tpu_custom_call.1} parent=1 // pred_region
      %s318 = ssub.s32 16, 16
      %319 = vsyncadd [#allocation4], %s318
      %s321 = sshll.u32 [#allocation3], 4
      %s322 = int_to_ptr.vmem [resolvable:$true] %s321
      %324 = dma.vmem_to_hbm [thread:$0]  %s322, 16, %s9, [#allocation4]
    $region41: #{tpu_custom_call.1} parent=1 // pred_fallthru
      _
    // Predicated region
    $region42: #{tpu_custom_call.1} parent=1 // pred_check
      _
    $region43: #{tpu_custom_call.1} parent=1 // pred_check_branch
      %326 = sbr.rel (0) target = $region45
    $region44: #{tpu_custom_call.1} parent=1 // pred_region
      %327 = dma.done [#allocation4], 16
    $region45: #{tpu_custom_call.1} parent=1 // pred_fallthru
      _
    %328 = vsyncpa [#allocation4], 1

</llo_original>
